<compile_context>
chip_gen: v5e
topology: v5e:2x2
jax: 0.10.0
libtpu: 0.0.40
codegen_flags: <defaults>
</compile_context>

<pallas_src>
import jax
import jax.numpy as jnp
from jax import lax
from jax.experimental import pallas as pl
from jax.experimental.pallas import tpu as pltpu

# ---------------- configuration (small stand-ins for the real module dims) -----
B, T = 2, 8                     # batch, clip length
C_IN, H, W = 3, 28, 16          # per-frame NCHW input fed to the "base"
PH, PW = 4, 4                   # synthetic base stem: patch conv kernel == stride
GH, GW = H // PH, W // PW       # 7 x 4 feature map  -> attention_conv kernel [7, 4]
S = GH * GW                     # 28 spatial positions
FEAT = 128                      # stand-in for feat_dim = 2048
MID = 32                        # stand-in for middle_dim = 256
NCLS = 10                       # num_classes
IFFR = True                     # kwargs['iffr']

MID_PAD = 128                   # lane-dense middle_dim (MID=256 at production: no-op)
CLS_PAD = 128                   # lane-dense classifier output width (>= NCLS)
K_IN = C_IN * PH * PW           # 48 patch-contraction width
K_PAD = 128                     # padded to a full MXU contraction depth

# Head tiling (generation-aware):
#   BBLK: batch elements per head block -> BBLK*T MXU rows; target >=128..256 but
#   keep >=2 "parallel" batch blocks for v7x's 2 TensorCores when B allows.
#   TS:   spatial positions per reduction chunk; largest divisor of S whose bf16
#   w_att chunk fits W_ATT_CHUNK_BUDGET (sized for v7x's 64 MiB VMEM; on v5e/v6e
#   the whole w_att is typically resident -> kblocks == 1).
W_ATT_CHUNK_BUDGET = 8 << 20    # bytes of bf16 w_att per reduction chunk


def _pick_bblk(b, t):
    target = max(1, 256 // t)
    for cand in range(min(b, target), 0, -1):
        if b % cand == 0 and (b // cand >= 2 or cand == b):
            return cand
    return b


def _pick_ts(s, feat, mid_pad, budget=W_ATT_CHUNK_BUDGET):
    for ts in range(s, 0, -1):
        if s % ts == 0 and ts * feat * mid_pad * 2 <= budget:
            return ts
    return 1


BBLK = _pick_bblk(B, T)         # = B at demo dims (B too small for both goals)
TS = _pick_ts(S, FEAT, MID_PAD)  # = S at demo dims -> single reduction step
TK = TS * FEAT                  # contraction chunk width
KTOT = S * FEAT                 # full contraction width
KBLOCKS = S // TS


# ------------------------------ Pallas kernels ---------------------------------
def base_kernel(p_ref, w_ref, b_ref, o_ref):
    """Synthetic 'base' stem: patchify conv == matmul over patches, + bias, ReLU."""
    o_ref[...] = jnp.maximum(
        jnp.dot(p_ref[...], w_ref[...], preferred_element_type=jnp.float32)
        + b_ref[...],
        0.0,
    ).astype(o_ref.dtype)        # emitted as bf16: halves the base->head HBM traffic


def make_head_kernel(iffr: bool):
    def head_kernel(x_ref, w_att_ref, b_att_ref, w_tc_ref, b_tc_ref,
                    w_cls_ref, b_cls_ref, o_ref, acc_a, acc_pool):
        # grid = (batch blocks [parallel], S*FEAT reduction chunks [arbitrary])
        ik = pl.program_id(1)
        nk = pl.num_programs(1)

        @pl.when(ik == 0)
        def _init():
            acc_a[...] = jnp.zeros_like(acc_a)
            acc_pool[...] = jnp.zeros_like(acc_pool)

        x = x_ref[...]                                   # (BBLK, T, TK) bf16, FEAT minor
        # attention_conv partial matmul: bf16 x bf16 on the MXU, f32 accumulation,
        # batched over all BBLK*T frames in the block.
        xf = x.reshape(BBLK * T, TK)
        acc_a[...] += jnp.dot(xf, w_att_ref[...],
                              preferred_element_type=jnp.float32)
        # avg_pool2d partial sums: accumulate slice-by-slice directly into the f32
        # scratch (no large live temporary -> no vreg spill traffic at FEAT=2048).
        for j in range(TS):
            acc_pool[...] += x[:, :, j * FEAT:(j + 1) * FEAT].astype(jnp.float32)

        @pl.when(ik == nk - 1)
        def _finalize():
            # attention_conv bias + ReLU  (padded MID columns stay exactly 0)
            a3 = jnp.maximum(acc_a[...] + b_att_ref[...], 0.0)
            a3 = a3.reshape(BBLK, T, MID_PAD)            # time on the sublane axis

            # attention_tconv: Conv1d(MID -> 1, kernel=3, padding=1) over time.
            # Shifted copies via XLU sublane rolls, zeroing the wrapped row.
            tpos = lax.broadcasted_iota(jnp.int32, (BBLK, T, MID_PAD), 1)
            left = jnp.where(tpos >= 1, pltpu.roll(a3, 1, axis=1), 0.0)
            right = jnp.where(tpos <= T - 2, pltpu.roll(a3, T - 1, axis=1), 0.0)
            w0 = w_tc_ref[0:1, :]
            w1 = w_tc_ref[1:2, :]
            w2 = w_tc_ref[2:3, :]
            score = jnp.sum(left * w0 + a3 * w1 + right * w2,
                            axis=2, keepdims=True) + b_tc_ref[0, 0]
            score = jnp.maximum(score, 0.0)              # (BBLK, T, 1)

            # softmax over time (EUP reciprocal)
            score = score - jnp.max(score, axis=1, keepdims=True)
            e = jnp.exp(score)
            a_w = e * pl.reciprocal(jnp.sum(e, axis=1, keepdims=True), approx=True)

            # avg_pool2d over the full 7x4 spatial extent
            x_pool = acc_pool[...] * (1.0 / S)           # (BBLK, T, FEAT) f32
            att_x = x_pool * a_w

            if iffr:
                # Inter_frame_feature_reorganization (batched over BBLK).
                # diag(m m^T) == 1 for L2-normalized m, so spM == 1.0 exactly
                # (relies on the +1e-12 eps covering the all-zero-row hazard).
                inv_l2 = lax.rsqrt(
                    jnp.sum(att_x * att_x, axis=2, keepdims=True) + 1e-12)
                m = att_x * inv_l2                       # L2-normalized rows
                mpM = jnp.einsum("btf,buf->btu", m, m,
                                 preferred_element_type=jnp.float32)
                ii = lax.broadcasted_iota(jnp.int32, (T, T), 0)
                jj = lax.broadcasted_iota(jnp.int32, (T, T), 1)
                eye = (ii == jj).astype(jnp.float32)
                dM = (eye + 1.0) - mpM
                # torch F.softmax(dM, dim=1) on a (t, t) matrix is a row softmax
                # == softmax over the last axis here.
                dM = dM - jnp.max(dM, axis=2, keepdims=True)
                ed = jnp.exp(dM)
                dM = ed * pl.reciprocal(jnp.sum(ed, axis=2, keepdims=True),
                                        approx=True)
                att_x = jnp.einsum("btu,buf->btf", dM, att_x,
                                   preferred_element_type=jnp.float32)

            # temporal sum -> f, then classifier (training path, loss == {'xent'})
            f = jnp.sum(att_x, axis=1)                   # (BBLK, FEAT)
            o_ref[...] = jnp.dot(f, w_cls_ref[...],
                                 preferred_element_type=jnp.float32) + b_cls_ref[...]

    return head_kernel


# ------------------------------ pallas_call wrappers ----------------------------
def _pick_tile(m, cap=1024):
    """Largest divisor of m that is <= cap and a multiple of 8 (else m)."""
    for c in range(min(m, cap), 0, -1):
        if m % c == 0 and (c % 8 == 0 or c == m):
            return c
    return m


def base_call(patches, w, b):
    M, K = patches.shape
    N = w.shape[1]
    tm = _pick_tile(M)
    return pl.pallas_call(
        base_kernel,
        out_shape=jax.ShapeDtypeStruct((M, N), jnp.bfloat16),
        grid=(M // tm,),
        in_specs=[
            pl.BlockSpec((tm, K), lambda i: (i, 0)),
            pl.BlockSpec((K, N), lambda i: (0, 0)),
            pl.BlockSpec((1, N), lambda i: (0, 0)),
        ],
        out_specs=pl.BlockSpec((tm, N), lambda i: (i, 0)),
        compiler_params=pltpu.CompilerParams(dimension_semantics=("parallel",)),
    )(patches, w, b)


def head_call(feat, w_att, b_att, w_tc, b_tc, w_cls_pad, b_cls_pad):
    b, t, k = feat.shape
    assert (b, t, k) == (B, T, KTOT)
    out = pl.pallas_call(
        make_head_kernel(IFFR),
        out_shape=jax.ShapeDtypeStruct((B, CLS_PAD), jnp.float32),
        grid=(B // BBLK, KBLOCKS),
        in_specs=[
            pl.BlockSpec((BBLK, T, TK), lambda ib, ik: (ib, 0, ik)),      # bf16
            pl.BlockSpec((TK, MID_PAD), lambda ib, ik: (ik, 0)),          # bf16
            pl.BlockSpec((1, MID_PAD), lambda ib, ik: (0, 0)),
            pl.BlockSpec((3, MID_PAD), lambda ib, ik: (0, 0)),
            pl.BlockSpec(memory_space=pltpu.MemorySpace.SMEM),            # b_tc scalar
            pl.BlockSpec((FEAT, CLS_PAD), lambda ib, ik: (0, 0)),
            pl.BlockSpec((1, CLS_PAD), lambda ib, ik: (0, 0)),
        ],
        out_specs=pl.BlockSpec((BBLK, CLS_PAD), lambda ib, ik: (ib, 0)),
        scratch_shapes=[
            pltpu.VMEM((BBLK * T, MID_PAD), jnp.float32),    # attention_conv accumulator
            pltpu.VMEM((BBLK, T, FEAT), jnp.float32),        # spatial-pool accumulator
        ],
        compiler_params=pltpu.CompilerParams(
            dimension_semantics=("parallel", "arbitrary"),
            vmem_limit_bytes=32 * 1024 * 1024),
    )(feat, w_att, b_att, w_tc, b_tc, w_cls_pad, b_cls_pad)
    return out[:, :NCLS]


# ------------------------------ glue (plain JAX) --------------------------------
def patchify(x_nchw):
    """(bt, C, H, W) -> (bt*GH*GW, C*PH*PW) patches for the synthetic base stem."""
    bt = x_nchw.shape[0]
    xp = x_nchw.reshape(bt, C_IN, GH, PH, GW, PW)
    xp = xp.transpose(0, 2, 4, 1, 3, 5)            # (bt, GH, GW, C, PH, PW)
    return xp.reshape(bt * GH * GW, C_IN * PH * PW)


def init_params(key):
    ks = jax.random.split(key, 8)
    return {
        "w_base": jax.random.normal(ks[0], (FEAT, C_IN, PH, PW), jnp.float32) * 0.05,
        "b_base": jax.random.normal(ks[1], (FEAT,), jnp.float32) * 0.01,
        "w_att": jax.random.normal(ks[2], (MID, FEAT, GH, GW), jnp.float32) * 0.02,   # Conv2d(FEAT,MID,[7,4])
        "b_att": jax.random.normal(ks[3], (MID,), jnp.float32) * 0.01,
        "w_tc": jax.random.normal(ks[4], (1, MID, 3), jnp.float32) * 0.1,             # Conv1d(MID,1,3,pad=1)
        "b_tc": jax.random.normal(ks[5], (1,), jnp.float32) * 0.01,
        "w_cls": jax.random.normal(ks[6], (NCLS, FEAT), jnp.float32) * 0.05,          # Linear(FEAT,NCLS)
        "b_cls": jax.random.normal(ks[7], (NCLS,), jnp.float32) * 0.01,
    }


def prepare_params(p):
    """One-time weight relayouts into kernel layouts (hoisted out of forward())."""
    # attention_conv weight flattened to the (gh, gw, feat) lane order, bf16, MID-padded.
    w_att = p["w_att"].transpose(0, 2, 3, 1).reshape(MID, S * FEAT).T       # (S*FEAT, MID)
    w_att_p = jnp.zeros((S * FEAT, MID_PAD), jnp.bfloat16)
    w_att_p = w_att_p.at[:, :MID].set(w_att.astype(jnp.bfloat16))
    b_att_p = jnp.zeros((1, MID_PAD), jnp.float32).at[:, :MID].set(p["b_att"][None, :])
    w_tc_p = jnp.zeros((3, MID_PAD), jnp.float32).at[:, :MID].set(p["w_tc"][0].T)
    b_tc = p["b_tc"].reshape(1, 1).astype(jnp.float32)
    w_cls_p = jnp.zeros((FEAT, CLS_PAD), jnp.float32).at[:, :NCLS].set(p["w_cls"].T)
    b_cls_p = jnp.zeros((1, CLS_PAD), jnp.float32).at[:, :NCLS].set(p["b_cls"][None, :])
    # base stem weight, contraction padded 48 -> 128.
    w_base = jnp.zeros((K_PAD, FEAT), jnp.float32)
    w_base = w_base.at[:K_IN, :].set(p["w_base"].reshape(FEAT, -1).T)
    b_base = p["b_base"].reshape(1, FEAT)
    return {"w_att": w_att_p, "b_att": b_att_p, "w_tc": w_tc_p, "b_tc": b_tc,
            "w_cls": w_cls_p, "b_cls": b_cls_p, "w_base": w_base, "b_base": b_base}


def forward(x, pp):
    """Pallas implementation of ResNet50TA.forward (training mode, loss={'xent'})."""
    b, t = x.shape[0], x.shape[1]
    xf = x.reshape(b * t, C_IN, H, W)

    # synthetic "base": patchify conv, rows ordered (b, t, gh, gw), FEAT lane-minor
    patches = patchify(xf)
    patches = jnp.pad(patches, ((0, 0), (0, K_PAD - K_IN)))             # K 48 -> 128
    base = base_call(patches, pp["w_base"], pp["b_base"])               # (b*t*S, FEAT) bf16

    # pure row-major reshape into the head's lane-dense layout: no transpose.
    feat = base.reshape(b, t, S * FEAT)

    return head_call(feat, pp["w_att"], pp["b_att"], pp["w_tc"], pp["b_tc"],
                     pp["w_cls"], pp["b_cls"])


def forward_ref(x, p):
    """Pure-JAX reference mirroring the PyTorch math (bf16 casts mirrored)."""
    b, t = x.shape[0], x.shape[1]
    xf = x.reshape(b * t, C_IN, H, W)
    patches = patchify(xf)
    base = jnp.maximum(patches @ p["w_base"].reshape(FEAT, -1).T + p["b_base"][None, :], 0.0)
    base = base.astype(jnp.bfloat16).astype(jnp.float32)                # bf16 handoff
    feat4 = base.reshape(b, t, GH, GW, FEAT)                            # (b,t,gh,gw,feat)

    # attention_conv (Conv2d FEAT->MID, kernel [7,4]) + ReLU  (bf16 weight mirrored)
    w_att = p["w_att"].astype(jnp.bfloat16).astype(jnp.float32)
    a = jnp.maximum(
        jnp.einsum("ntghc,mcgh->ntm", feat4, w_att) + p["b_att"][None, None, :],
        0.0)                                                            # (b, t, MID)

    # attention_tconv (Conv1d MID->1, kernel 3, padding 1) + ReLU
    w = p["w_tc"][0]                                                    # (MID, 3)
    left = jnp.pad(a, ((0, 0), (1, 0), (0, 0)))[:, :t, :]
    right = jnp.pad(a, ((0, 0), (0, 1), (0, 0)))[:, 1:, :]
    score = left @ w[:, 0] + a @ w[:, 1] + right @ w[:, 2] + p["b_tc"][0]
    score = jnp.maximum(score, 0.0)
    aw = jax.nn.softmax(score, axis=1)                                  # (b, t)

    xpool = feat4.mean(axis=(2, 3))                                     # (b, t, FEAT)
    att_x = xpool * aw[:, :, None]
    if IFFR:
        m = att_x / jnp.sqrt(jnp.sum(att_x * att_x, axis=2, keepdims=True) + 1e-12)
        spV = 0.5 * jnp.sum(m * m, axis=2)                              # (b, t)
        spM = spV[:, None, :] + spV[:, :, None]
        mpM = jnp.einsum("bic,bjc->bij", m, m)
        dM = jnp.eye(t, dtype=jnp.float32)[None] + spM - mpM
        dM = jax.nn.softmax(dM, axis=2)  # torch softmax(dim=1) on (t,t) == row softmax
        att_x = jnp.einsum("bij,bjc->bic", dM, att_x)
    f = att_x.sum(axis=1)
    return f @ p["w_cls"].T + p["b_cls"][None, :]


if __name__ == "__main__":
    key = jax.random.PRNGKey(0)
    kx, kp = jax.random.split(key)
    x = jax.random.normal(kx, (B, T, C_IN, H, W), jnp.float32)
    params = init_params(kp)
    prepared = prepare_params(params)   # weight relayouts done once, not per forward

    y = jax.block_until_ready(forward(x, prepared))
    assert y.shape == (B, NCLS), y.shape

    y_ref = forward_ref(x, params)
    # bf16 operands + approx-reciprocal softmax denominators -> a few e-3 rel. error
    assert jnp.allclose(y, y_ref, rtol=5e-3, atol=5e-3), "mismatch vs JAX reference"

    print("KERNEL_OK")
</pallas_src>

<mosaic_0001>
module attributes {stable_mosaic.version = 11 : i64} {
  func.func @base_kernel(%arg0: i32, %arg1: memref<448x128xf32, #tpu.memory_space<vmem>>, %arg2: memref<128x128xf32, #tpu.memory_space<vmem>>, %arg3: memref<1x128xf32, #tpu.memory_space<vmem>>, %arg4: memref<448x128xbf16, #tpu.memory_space<vmem>>) attributes {dimension_semantics = [#tpu.dimension_semantics<parallel>], iteration_bounds = array<i64: 1>, scalar_prefetch = 0 : i64, scratch_operands = 0 : i64, tpu.core_type = #tpu.core_type<tc>, window_params = [{transform_indices = @transform_0, window_bounds = array<i64: 448, 128>}, {pipeline_mode = #tpu.pipeline_mode<synchronous>, transform_indices = @transform_1, window_bounds = array<i64: 128, 128>}, {pipeline_mode = #tpu.pipeline_mode<synchronous>, transform_indices = @transform_2, window_bounds = array<i64: 1, 128>}, {transform_indices = @transform_3, window_bounds = array<i64: 448, 128>}]} {
    %c0 = arith.constant 0 : index
    %c0_0 = arith.constant 0 : index
    %0 = vector.load %arg1[%c0, %c0_0] : memref<448x128xf32, #tpu.memory_space<vmem>>, vector<448x128xf32>
    %c0_1 = arith.constant 0 : index
    %c0_2 = arith.constant 0 : index
    %1 = vector.load %arg2[%c0_1, %c0_2] : memref<128x128xf32, #tpu.memory_space<vmem>>, vector<128x128xf32>
    %cst = arith.constant dense<0.000000e+00> : vector<448x128xf32>
    %2 = tpu.matmul %0, %1, %cst {dimension_numbers = #tpu.dot_dimension_numbers<[1], [0], [0], [1], [0, 0, 1, 1], [], []>} : vector<448x128xf32>, vector<128x128xf32>, vector<448x128xf32> -> vector<448x128xf32>
    %c0_3 = arith.constant 0 : index
    %c0_4 = arith.constant 0 : index
    %3 = vector.load %arg3[%c0_3, %c0_4] : memref<1x128xf32, #tpu.memory_space<vmem>>, vector<1x128xf32>
    %4 = vector.broadcast %3 : vector<1x128xf32> to vector<448x128xf32>
    %5 = arith.addf %2, %4 : vector<448x128xf32>
    %cst_5 = arith.constant 0.000000e+00 : f32
    %6 = vector.broadcast %cst_5 : f32 to vector<448x128xf32>
    %7 = arith.maximumf %5, %6 : vector<448x128xf32>
    %8 = arith.truncf %7 : vector<448x128xf32> to vector<448x128xbf16>
    %c0_6 = arith.constant 0 : index
    %c0_7 = arith.constant 0 : index
    %9 = vector.load %arg4[%c0_6, %c0_7] : memref<448x128xbf16, #tpu.memory_space<vmem>>, vector<448x128xbf16>
    tpu.vector_store %arg4[%c0_6, %c0_7], %8 {strides = array<i32>} : memref<448x128xbf16, #tpu.memory_space<vmem>>, vector<448x128xbf16>,
    return
  }
  func.func @transform_0(%arg0: i32) -> (i32, i32) {
    %c0_i32 = arith.constant 0 : i32
    %c0_i32_0 = arith.constant 0 : i32
    return %arg0, %c0_i32 : i32, i32
  }
  func.func @transform_1(%arg0: i32) -> (i32, i32) {
    %c0_i32 = arith.constant 0 : i32
    %c0_i32_0 = arith.constant 0 : i32
    %c0_i32_1 = arith.constant 0 : i32
    return %c0_i32, %c0_i32_0 : i32, i32
  }
  func.func @transform_2(%arg0: i32) -> (i32, i32) {
    %c0_i32 = arith.constant 0 : i32
    %c0_i32_0 = arith.constant 0 : i32
    %c0_i32_1 = arith.constant 0 : i32
    return %c0_i32, %c0_i32_0 : i32, i32
  }
  func.func @transform_3(%arg0: i32) -> (i32, i32) {
    %c0_i32 = arith.constant 0 : i32
    %c0_i32_0 = arith.constant 0 : i32
    return %arg0, %c0_i32 : i32, i32
  }
}

</mosaic_0001>

<llo_original>
// kernel: tpu_custom_call.1
$region0: #{tpu_custom_call.1}
  #allocation0 [shape = 'u32[]', space=smem, size = 0x4, offset = 0x4, fixed_abs, tag = 'smem constant byte address 0x4 - core index']
  #allocation1 [shape = 'u32[72,128]{1,0:T(1,128)}', space=vmem, size = 0x9000, scoped, tag = 'internal scratch']
  %s0 = inlined_call_operand.hbm [shape: f32[448,128], index: 0, kind: input, shape index: {}]
  %s1 = inlined_call_operand.hbm [shape: f32[128,128], index: 1, kind: input, shape index: {}]
  %s2 = inlined_call_operand.vmem [shape: f32[1,128], index: 2, kind: input, shape index: {}]
  %s3 = inlined_call_operand.hbm [shape: bf16[448,128], index: 3, kind: output, shape index: {}]
  %s4 = sld [smem:[#allocation0]]
  $region30: #{tpu_custom_call.1} parent=0
    _
  %s6 = ssub.s32 1, %s4
  %s7 = scalar_select 0, %s6, %s4
  $region1: #{tpu_custom_call.1} parent=0
    #allocation2 [shape = 'u8[229376]{0}', space=vmem, size = 0x38000, scoped, tag = 'input window, operand 0, single buffered']
    #allocation3 [shape = 's32[1]{0}', space=sflag, size = 0x4, scoped, tag = 'scoped memory for tpu_custom_call.1']
    #allocation4 [shape = 's32[1]{0}', space=sflag, size = 0x4, scoped, tag = 'scoped memory for tpu_custom_call.1']
    #allocation5 [shape = 'u8[65536]{0}', space=vmem, size = 0x10000, scoped, tag = 'input window, operand 1, single buffered']
    #allocation6 [shape = 's32[1]{0}', space=sflag, size = 0x4, scoped, tag = 'scoped memory for tpu_custom_call.1']
    #allocation7 [shape = 'u8[114688]{0}', space=vmem, size = 0x1c000, scoped, tag = 'output window, operand 0, single buffered']
    %8 = vsyncpa [#allocation3], 0
    %9 = vsyncpa [#allocation6], 0
    %10 = vsyncpa [#allocation4], 0
    // Predicated region
    $region2: #{tpu_custom_call.1} parent=1 // pred_check
      _
    $region3: #{tpu_custom_call.1} parent=1 // pred_check_branch
      %12 = sbr.rel (0) target = $region5
    $region4: #{tpu_custom_call.1} parent=1 // pred_region
      %14 = vsyncadd [#allocation3], 0
      %s15 = sshll.u32 %s0, 4
      %s16 = int_to_ptr.hbm [resolvable:$true] %s15
      %s17 = sshll.u32 [#allocation2], 4
      %s18 = int_to_ptr.vmem [resolvable:$true] %s17
      %23 = dma.hbm_to_vmem [thread:$0]  %s16, 7168, %s18, [#allocation3], 128, 128, 8
    $region5: #{tpu_custom_call.1} parent=1 // pred_fallthru
      _
    // Predicated region
    $region6: #{tpu_custom_call.1} parent=1 // pred_check
      _
    $region7: #{tpu_custom_call.1} parent=1 // pred_check_branch
      %25 = sbr.rel (0) target = $region9
    $region8: #{tpu_custom_call.1} parent=1 // pred_region
      %27 = vsyncadd [#allocation6], 0
      %s28 = sshll.u32 %s1, 4
      %s29 = int_to_ptr.hbm [resolvable:$true] %s28
      %s30 = sshll.u32 [#allocation5], 4
      %s31 = int_to_ptr.vmem [resolvable:$true] %s30
      %36 = dma.hbm_to_vmem [thread:$0]  %s29, 2048, %s31, [#allocation6], 128, 128, 8
    $region9: #{tpu_custom_call.1} parent=1 // pred_fallthru
      _
    // Predicated region
    $region10: #{tpu_custom_call.1} parent=1 // pred_check
      _
    $region11: #{tpu_custom_call.1} parent=1 // pred_check_branch
      %38 = sbr.rel (0) target = $region13
    $region12: #{tpu_custom_call.1} parent=1 // pred_region
      _
    $region13: #{tpu_custom_call.1} parent=1 // pred_fallthru
      _
    // Predicated region
    $region14: #{tpu_custom_call.1} parent=1 // pred_check
      _
    $region15: #{tpu_custom_call.1} parent=1 // pred_check_branch
      %40 = sbr.rel (0) target = $region17
    $region16: #{tpu_custom_call.1} parent=1 // pred_region
      %42 = dma.done [#allocation3], 7168
    $region17: #{tpu_custom_call.1} parent=1 // pred_fallthru
      _
    // Predicated region
    $region18: #{tpu_custom_call.1} parent=1 // pred_check
      _
    $region19: #{tpu_custom_call.1} parent=1 // pred_check_branch
      %44 = sbr.rel (0) target = $region21
    $region20: #{tpu_custom_call.1} parent=1 // pred_region
      %46 = dma.done [#allocation6], 2048
    $region21: #{tpu_custom_call.1} parent=1 // pred_fallthru
      _
    %v47 = vld [vmem:[#allocation2] sm:$0xff]
    %v48 = vld [vmem:[#allocation2 + $0x8] sm:$0xff]
    %v49 = vld [vmem:[#allocation2 + $0x10] sm:$0xff]
    %v50 = vld [vmem:[#allocation2 + $0x18] sm:$0xff]
    %v51 = vld [vmem:[#allocation2 + $0x20] sm:$0xff]
    %v52 = vld [vmem:[#allocation2 + $0x28] sm:$0xff]
    %v53 = vld [vmem:[#allocation2 + $0x30] sm:$0xff]
    %v54 = vld [vmem:[#allocation2 + $0x38] sm:$0xff]
    %v55 = vld [vmem:[#allocation2 + $0x40] sm:$0xff]
    %v56 = vld [vmem:[#allocation2 + $0x48] sm:$0xff]
    %v57 = vld [vmem:[#allocation2 + $0x50] sm:$0xff]
    %v58 = vld [vmem:[#allocation2 + $0x58] sm:$0xff]
    %v59 = vld [vmem:[#allocation2 + $0x60] sm:$0xff]
    %v60 = vld [vmem:[#allocation2 + $0x68] sm:$0xff]
    %v61 = vld [vmem:[#allocation2 + $0x70] sm:$0xff]
    %v62 = vld [vmem:[#allocation2 + $0x78] sm:$0xff]
    %v63 = vld [vmem:[#allocation2 + $0x80] sm:$0xff]
    %v64 = vld [vmem:[#allocation2 + $0x88] sm:$0xff]
    %v65 = vld [vmem:[#allocation2 + $0x90] sm:$0xff]
    %v66 = vld [vmem:[#allocation2 + $0x98] sm:$0xff]
    %v67 = vld [vmem:[#allocation2 + $0xa0] sm:$0xff]
    %v68 = vld [vmem:[#allocation2 + $0xa8] sm:$0xff]
    %v69 = vld [vmem:[#allocation2 + $0xb0] sm:$0xff]
    %v70 = vld [vmem:[#allocation2 + $0xb8] sm:$0xff]
    %v71 = vld [vmem:[#allocation2 + $0xc0] sm:$0xff]
    %v72 = vld [vmem:[#allocation2 + $0xc8] sm:$0xff]
    %v73 = vld [vmem:[#allocation2 + $0xd0] sm:$0xff]
    %v74 = vld [vmem:[#allocation2 + $0xd8] sm:$0xff]
    %v75 = vld [vmem:[#allocation2 + $0xe0] sm:$0xff]
    %v76 = vld [vmem:[#allocation2 + $0xe8] sm:$0xff]
    %v77 = vld [vmem:[#allocation2 + $0xf0] sm:$0xff]
    %v78 = vld [vmem:[#allocation2 + $0xf8] sm:$0xff]
    %v79 = vld [vmem:[#allocation2 + $0x100] sm:$0xff]
    %v80 = vld [vmem:[#allocation2 + $0x108] sm:$0xff]
    %v81 = vld [vmem:[#allocation2 + $0x110] sm:$0xff]
    %v82 = vld [vmem:[#allocation2 + $0x118] sm:$0xff]
    %v83 = vld [vmem:[#allocation2 + $0x120] sm:$0xff]
    %v84 = vld [vmem:[#allocation2 + $0x128] sm:$0xff]
    %v85 = vld [vmem:[#allocation2 + $0x130] sm:$0xff]
    %v86 = vld [vmem:[#allocation2 + $0x138] sm:$0xff]
    %v87 = vld [vmem:[#allocation2 + $0x140] sm:$0xff]
    %v88 = vld [vmem:[#allocation2 + $0x148] sm:$0xff]
    %v89 = vld [vmem:[#allocation2 + $0x150] sm:$0xff]
    %v90 = vld [vmem:[#allocation2 + $0x158] sm:$0xff]
    %v91 = vld [vmem:[#allocation2 + $0x160] sm:$0xff]
    %v92 = vld [vmem:[#allocation2 + $0x168] sm:$0xff]
    %v93 = vld [vmem:[#allocation2 + $0x170] sm:$0xff]
    %v94 = vld [vmem:[#allocation2 + $0x178] sm:$0xff]
    %v95 = vld [vmem:[#allocation2 + $0x180] sm:$0xff]
    %v96 = vld [vmem:[#allocation2 + $0x188] sm:$0xff]
    %v97 = vld [vmem:[#allocation2 + $0x190] sm:$0xff]
    %v98 = vld [vmem:[#allocation2 + $0x198] sm:$0xff]
    %v99 = vld [vmem:[#allocation2 + $0x1a0] sm:$0xff]
    %v100 = vld [vmem:[#allocation2 + $0x1a8] sm:$0xff]
    %v101 = vld [vmem:[#allocation2 + $0x1b0] sm:$0xff]
    %v102 = vld [vmem:[#allocation2 + $0x1b8] sm:$0xff]
    %v103 = vld [vmem:[#allocation5] sm:$0xff]
    %v104 = vld [vmem:[#allocation5 + $0x8] sm:$0xff]
    %v105 = vld [vmem:[#allocation5 + $0x10] sm:$0xff]
    %v106 = vld [vmem:[#allocation5 + $0x18] sm:$0xff]
    %v107 = vld [vmem:[#allocation5 + $0x20] sm:$0xff]
    %v108 = vld [vmem:[#allocation5 + $0x28] sm:$0xff]
    %v109 = vld [vmem:[#allocation5 + $0x30] sm:$0xff]
    %v110 = vld [vmem:[#allocation5 + $0x38] sm:$0xff]
    %v111 = vld [vmem:[#allocation5 + $0x40] sm:$0xff]
    %v112 = vld [vmem:[#allocation5 + $0x48] sm:$0xff]
    %v113 = vld [vmem:[#allocation5 + $0x50] sm:$0xff]
    %v114 = vld [vmem:[#allocation5 + $0x58] sm:$0xff]
    %v115 = vld [vmem:[#allocation5 + $0x60] sm:$0xff]
    %v116 = vld [vmem:[#allocation5 + $0x68] sm:$0xff]
    %v117 = vld [vmem:[#allocation5 + $0x70] sm:$0xff]
    %v118 = vld [vmem:[#allocation5 + $0x78] sm:$0xff]
    %v119 = vld [vmem:[%s2] sm:$0x1]
    %v121 = vperm.slane %v119, 0
    %123 = vmatpush.msra.mxu0 %v118
    %124 = vmatpush.msra.mxu0 %v117
    %125 = vmatpush.msra.mxu0 %v116
    %126 = vmatpush.msra.mxu0 %v115
    %127 = vmatpush.msra.mxu0 %v114
    %128 = vmatpush.msra.mxu0 %v113
    %129 = vmatpush.msra.mxu0 %v112
    %130 = vmatpush.msra.mxu0 %v111
    %131 = vmatpush.msra.mxu0 %v110
    %132 = vmatpush.msra.mxu0 %v109
    %133 = vmatpush.msra.mxu0 %v108
    %134 = vmatpush.msra.mxu0 %v107
    %135 = vmatpush.msra.mxu0 %v106
    %136 = vmatpush.msra.mxu0 %v105
    %137 = vmatpush.msra.mxu0 %v104
    %138 = vmatpush.msra.mxu0 %v103
    %139 = vmatmul.f32.gmra.mxu0 %v47
    %v140 = vpop.f32.mrf.mxu0
    %v141 = vadd.f32 %v121, %v140
    %142 = vmatmul.f32.gmra.mxu0 %v48
    %v143 = vpop.f32.mrf.mxu0
    %v144 = vadd.f32 %v121, %v143
    %145 = vmatmul.f32.gmra.mxu0 %v49
    %v146 = vpop.f32.mrf.mxu0
    %v147 = vadd.f32 %v121, %v146
    %148 = vmatmul.f32.gmra.mxu0 %v50
    %v149 = vpop.f32.mrf.mxu0
    %v150 = vadd.f32 %v121, %v149
    %151 = vmatmul.f32.gmra.mxu0 %v51
    %v152 = vpop.f32.mrf.mxu0
    %v153 = vadd.f32 %v121, %v152
    %154 = vmatmul.f32.gmra.mxu0 %v52
    %v155 = vpop.f32.mrf.mxu0
    %v156 = vadd.f32 %v121, %v155
    %157 = vmatmul.f32.gmra.mxu0 %v53
    %v158 = vpop.f32.mrf.mxu0
    %v159 = vadd.f32 %v121, %v158
    %160 = vmatmul.f32.gmra.mxu0 %v54
    %v161 = vpop.f32.mrf.mxu0
    %v162 = vadd.f32 %v121, %v161
    %163 = vmatmul.f32.gmra.mxu0 %v55
    %v164 = vpop.f32.mrf.mxu0
    %v165 = vadd.f32 %v121, %v164
    %166 = vmatmul.f32.gmra.mxu0 %v56
    %v167 = vpop.f32.mrf.mxu0
    %v168 = vadd.f32 %v121, %v167
    %169 = vmatmul.f32.gmra.mxu0 %v57
    %v170 = vpop.f32.mrf.mxu0
    %v171 = vadd.f32 %v121, %v170
    %172 = vmatmul.f32.gmra.mxu0 %v58
    %v173 = vpop.f32.mrf.mxu0
    %v174 = vadd.f32 %v121, %v173
    %175 = vmatmul.f32.gmra.mxu0 %v59
    %v176 = vpop.f32.mrf.mxu0
    %v177 = vadd.f32 %v121, %v176
    %178 = vmatmul.f32.gmra.mxu0 %v60
    %v179 = vpop.f32.mrf.mxu0
    %v180 = vadd.f32 %v121, %v179
    %181 = vmatmul.f32.gmra.mxu0 %v61
    %v182 = vpop.f32.mrf.mxu0
    %v183 = vadd.f32 %v121, %v182
    %184 = vmatmul.f32.gmra.mxu0 %v62
    %v185 = vpop.f32.mrf.mxu0
    %v186 = vadd.f32 %v121, %v185
    %187 = vmatmul.f32.gmra.mxu0 %v63
    %v188 = vpop.f32.mrf.mxu0
    %v189 = vadd.f32 %v121, %v188
    %190 = vmatmul.f32.gmra.mxu0 %v64
    %v191 = vpop.f32.mrf.mxu0
    %v192 = vadd.f32 %v121, %v191
    %193 = vmatmul.f32.gmra.mxu0 %v65
    %v194 = vpop.f32.mrf.mxu0
    %v195 = vadd.f32 %v121, %v194
    %196 = vmatmul.f32.gmra.mxu0 %v66
    %v197 = vpop.f32.mrf.mxu0
    %v198 = vadd.f32 %v121, %v197
    %199 = vmatmul.f32.gmra.mxu0 %v67
    %v200 = vpop.f32.mrf.mxu0
    %v201 = vadd.f32 %v121, %v200
    %202 = vmatmul.f32.gmra.mxu0 %v68
    %v203 = vpop.f32.mrf.mxu0
    %v204 = vadd.f32 %v121, %v203
    %205 = vmatmul.f32.gmra.mxu0 %v69
    %v206 = vpop.f32.mrf.mxu0
    %v207 = vadd.f32 %v121, %v206
    %208 = vmatmul.f32.gmra.mxu0 %v70
    %v209 = vpop.f32.mrf.mxu0
    %v210 = vadd.f32 %v121, %v209
    %211 = vmatmul.f32.gmra.mxu0 %v71
    %v212 = vpop.f32.mrf.mxu0
    %v213 = vadd.f32 %v121, %v212
    %214 = vmatmul.f32.gmra.mxu0 %v72
    %v215 = vpop.f32.mrf.mxu0
    %v216 = vadd.f32 %v121, %v215
    %217 = vmatmul.f32.gmra.mxu0 %v73
    %v218 = vpop.f32.mrf.mxu0
    %v219 = vadd.f32 %v121, %v218
    %220 = vmatmul.f32.gmra.mxu0 %v74
    %v221 = vpop.f32.mrf.mxu0
    %v222 = vadd.f32 %v121, %v221
    %223 = vmatmul.f32.gmra.mxu0 %v75
    %v224 = vpop.f32.mrf.mxu0
    %v225 = vadd.f32 %v121, %v224
    %226 = vmatmul.f32.gmra.mxu0 %v76
    %v227 = vpop.f32.mrf.mxu0
    %v228 = vadd.f32 %v121, %v227
    %229 = vmatmul.f32.gmra.mxu0 %v77
    %v230 = vpop.f32.mrf.mxu0
    %v231 = vadd.f32 %v121, %v230
    %232 = vmatmul.f32.gmra.mxu0 %v78
    %v233 = vpop.f32.mrf.mxu0
    %v234 = vadd.f32 %v121, %v233
    %235 = vmatmul.f32.gmra.mxu0 %v79
    %v236 = vpop.f32.mrf.mxu0
    %v237 = vadd.f32 %v121, %v236
    %238 = vmatmul.f32.gmra.mxu0 %v80
    %v239 = vpop.f32.mrf.mxu0
    %v240 = vadd.f32 %v121, %v239
    %241 = vmatmul.f32.gmra.mxu0 %v81
    %v242 = vpop.f32.mrf.mxu0
    %v243 = vadd.f32 %v121, %v242
    %244 = vmatmul.f32.gmra.mxu0 %v82
    %v245 = vpop.f32.mrf.mxu0
    %v246 = vadd.f32 %v121, %v245
    %247 = vmatmul.f32.gmra.mxu0 %v83
    %v248 = vpop.f32.mrf.mxu0
    %v249 = vadd.f32 %v121, %v248
    %250 = vmatmul.f32.gmra.mxu0 %v84
    %v251 = vpop.f32.mrf.mxu0
    %v252 = vadd.f32 %v121, %v251
    %253 = vmatmul.f32.gmra.mxu0 %v85
    %v254 = vpop.f32.mrf.mxu0
    %v255 = vadd.f32 %v121, %v254
    %256 = vmatmul.f32.gmra.mxu0 %v86
    %v257 = vpop.f32.mrf.mxu0
    %v258 = vadd.f32 %v121, %v257
    %259 = vmatmul.f32.gmra.mxu0 %v87
    %v260 = vpop.f32.mrf.mxu0
    %v261 = vadd.f32 %v121, %v260
    %262 = vmatmul.f32.gmra.mxu0 %v88
    %v263 = vpop.f32.mrf.mxu0
    %v264 = vadd.f32 %v121, %v263
    %265 = vmatmul.f32.gmra.mxu0 %v89
    %v266 = vpop.f32.mrf.mxu0
    %v267 = vadd.f32 %v121, %v266
    %268 = vmatmul.f32.gmra.mxu0 %v90
    %v269 = vpop.f32.mrf.mxu0
    %v270 = vadd.f32 %v121, %v269
    %271 = vmatmul.f32.gmra.mxu0 %v91
    %v272 = vpop.f32.mrf.mxu0
    %v273 = vadd.f32 %v121, %v272
    %274 = vmatmul.f32.gmra.mxu0 %v92
    %v275 = vpop.f32.mrf.mxu0
    %v276 = vadd.f32 %v121, %v275
    %277 = vmatmul.f32.gmra.mxu0 %v93
    %v278 = vpop.f32.mrf.mxu0
    %v279 = vadd.f32 %v121, %v278
    %280 = vmatmul.f32.gmra.mxu0 %v94
    %v281 = vpop.f32.mrf.mxu0
    %v282 = vadd.f32 %v121, %v281
    %283 = vmatmul.f32.gmra.mxu0 %v95
    %v284 = vpop.f32.mrf.mxu0
    %v285 = vadd.f32 %v121, %v284
    %286 = vmatmul.f32.gmra.mxu0 %v96
    %v287 = vpop.f32.mrf.mxu0
    %v288 = vadd.f32 %v121, %v287
    %289 = vmatmul.f32.gmra.mxu0 %v97
    %v290 = vpop.f32.mrf.mxu0
    %v291 = vadd.f32 %v121, %v290
    %292 = vmatmul.f32.gmra.mxu0 %v98
    %v293 = vpop.f32.mrf.mxu0
    %v294 = vadd.f32 %v121, %v293
    %295 = vmatmul.f32.gmra.mxu0 %v99
    %v296 = vpop.f32.mrf.mxu0
    %v297 = vadd.f32 %v121, %v296
    %298 = vmatmul.f32.gmra.mxu0 %v100
    %v299 = vpop.f32.mrf.mxu0
    %v300 = vadd.f32 %v121, %v299
    %301 = vmatmul.f32.gmra.mxu0 %v101
    %v302 = vpop.f32.mrf.mxu0
    %v303 = vadd.f32 %v121, %v302
    %304 = vmatmul.f32.gmra.mxu0 %v102
    %v305 = vpop.f32.mrf.mxu0
    %v306 = vadd.f32 %v121, %v305
    %307 = vdwg.mxu0
    %v308 = vmax.f32 %v141, 0.0
    %v309 = vmax.f32 %v144, 0.0
    %v310 = vmax.f32 %v147, 0.0
    %v311 = vmax.f32 %v150, 0.0
    %v312 = vmax.f32 %v153, 0.0
    %v313 = vmax.f32 %v156, 0.0
    %v314 = vmax.f32 %v159, 0.0
    %v315 = vmax.f32 %v162, 0.0
    %v316 = vmax.f32 %v165, 0.0
    %v317 = vmax.f32 %v168, 0.0
    %v318 = vmax.f32 %v171, 0.0
    %v319 = vmax.f32 %v174, 0.0
    %v320 = vmax.f32 %v177, 0.0
    %v321 = vmax.f32 %v180, 0.0
    %v322 = vmax.f32 %v183, 0.0
    %v323 = vmax.f32 %v186, 0.0
    %v324 = vmax.f32 %v189, 0.0
    %v325 = vmax.f32 %v192, 0.0
    %v326 = vmax.f32 %v195, 0.0
    %v327 = vmax.f32 %v198, 0.0
    %v328 = vmax.f32 %v201, 0.0
    %v329 = vmax.f32 %v204, 0.0
    %v330 = vmax.f32 %v207, 0.0
    %v331 = vmax.f32 %v210, 0.0
    %v332 = vmax.f32 %v213, 0.0
    %v333 = vmax.f32 %v216, 0.0
    %v334 = vmax.f32 %v219, 0.0
    %v335 = vmax.f32 %v222, 0.0
    %v336 = vmax.f32 %v225, 0.0
    %v337 = vmax.f32 %v228, 0.0
    %v338 = vmax.f32 %v231, 0.0
    %v339 = vmax.f32 %v234, 0.0
    %v340 = vmax.f32 %v237, 0.0
    %v341 = vmax.f32 %v240, 0.0
    %v342 = vmax.f32 %v243, 0.0
    %v343 = vmax.f32 %v246, 0.0
    %v344 = vmax.f32 %v249, 0.0
    %v345 = vmax.f32 %v252, 0.0
    %v346 = vmax.f32 %v255, 0.0
    %v347 = vmax.f32 %v258, 0.0
    %v348 = vmax.f32 %v261, 0.0
    %v349 = vmax.f32 %v264, 0.0
    %v350 = vmax.f32 %v267, 0.0
    %v351 = vmax.f32 %v270, 0.0
    %v352 = vmax.f32 %v273, 0.0
    %v353 = vmax.f32 %v276, 0.0
    %v354 = vmax.f32 %v279, 0.0
    %v355 = vmax.f32 %v282, 0.0
    %v356 = vmax.f32 %v285, 0.0
    %v357 = vmax.f32 %v288, 0.0
    %v358 = vmax.f32 %v291, 0.0
    %v359 = vmax.f32 %v294, 0.0
    %v360 = vmax.f32 %v297, 0.0
    %v361 = vmax.f32 %v300, 0.0
    %v362 = vmax.f32 %v303, 0.0
    %v363 = vmax.f32 %v306, 0.0
    %v364 = vpack.c.bf16 %v308, %v308
    %v365 = vpack.c.bf16 %v309, %v309
    %v366 = vpack.c.bf16 %v310, %v310
    %v367 = vpack.c.bf16 %v311, %v311
    %v368 = vpack.c.bf16 %v312, %v312
    %v369 = vpack.c.bf16 %v313, %v313
    %v370 = vpack.c.bf16 %v314, %v314
    %v371 = vpack.c.bf16 %v315, %v315
    %v372 = vpack.c.bf16 %v316, %v316
    %v373 = vpack.c.bf16 %v317, %v317
    %v374 = vpack.c.bf16 %v318, %v318
    %v375 = vpack.c.bf16 %v319, %v319
    %v376 = vpack.c.bf16 %v320, %v320
    %v377 = vpack.c.bf16 %v321, %v321
    %v378 = vpack.c.bf16 %v322, %v322
    %v379 = vpack.c.bf16 %v323, %v323
    %v380 = vpack.c.bf16 %v324, %v324
    %v381 = vpack.c.bf16 %v325, %v325
    %v382 = vpack.c.bf16 %v326, %v326
    %v383 = vpack.c.bf16 %v327, %v327
    %v384 = vpack.c.bf16 %v328, %v328
    %v385 = vpack.c.bf16 %v329, %v329
    %v386 = vpack.c.bf16 %v330, %v330
    %v387 = vpack.c.bf16 %v331, %v331
    %v388 = vpack.c.bf16 %v332, %v332
    %v389 = vpack.c.bf16 %v333, %v333
    %v390 = vpack.c.bf16 %v334, %v334
    %v391 = vpack.c.bf16 %v335, %v335
    %v392 = vpack.c.bf16 %v336, %v336
    %v393 = vpack.c.bf16 %v337, %v337
    %v394 = vpack.c.bf16 %v338, %v338
    %v395 = vpack.c.bf16 %v339, %v339
    %v396 = vpack.c.bf16 %v340, %v340
    %v397 = vpack.c.bf16 %v341, %v341
    %v398 = vpack.c.bf16 %v342, %v342
    %v399 = vpack.c.bf16 %v343, %v343
    %v400 = vpack.c.bf16 %v344, %v344
    %v401 = vpack.c.bf16 %v345, %v345
    %v402 = vpack.c.bf16 %v346, %v346
    %v403 = vpack.c.bf16 %v347, %v347
    %v404 = vpack.c.bf16 %v348, %v348
    %v405 = vpack.c.bf16 %v349, %v349
    %v406 = vpack.c.bf16 %v350, %v350
    %v407 = vpack.c.bf16 %v351, %v351
    %v408 = vpack.c.bf16 %v352, %v352
    %v409 = vpack.c.bf16 %v353, %v353
    %v410 = vpack.c.bf16 %v354, %v354
    %v411 = vpack.c.bf16 %v355, %v355
    %v412 = vpack.c.bf16 %v356, %v356
    %v413 = vpack.c.bf16 %v357, %v357
    %v414 = vpack.c.bf16 %v358, %v358
    %v415 = vpack.c.bf16 %v359, %v359
    %v416 = vpack.c.bf16 %v360, %v360
    %v417 = vpack.c.bf16 %v361, %v361
    %v418 = vpack.c.bf16 %v362, %v362
    %v419 = vpack.c.bf16 %v363, %v363
    %420 = vst [vmem:[#allocation7] sm:$0xf] %v364
    %421 = vst [vmem:[#allocation7 + $0x4] sm:$0xf] %v365
    %422 = vst [vmem:[#allocation7 + $0x8] sm:$0xf] %v366
    %423 = vst [vmem:[#allocation7 + $0xc] sm:$0xf] %v367
    %424 = vst [vmem:[#allocation7 + $0x10] sm:$0xf] %v368
    %425 = vst [vmem:[#allocation7 + $0x14] sm:$0xf] %v369
    %426 = vst [vmem:[#allocation7 + $0x18] sm:$0xf] %v370
    %427 = vst [vmem:[#allocation7 + $0x1c] sm:$0xf] %v371
    %428 = vst [vmem:[#allocation7 + $0x20] sm:$0xf] %v372
    %429 = vst [vmem:[#allocation7 + $0x24] sm:$0xf] %v373
    %430 = vst [vmem:[#allocation7 + $0x28] sm:$0xf] %v374
    %431 = vst [vmem:[#allocation7 + $0x2c] sm:$0xf] %v375
    %432 = vst [vmem:[#allocation7 + $0x30] sm:$0xf] %v376
    %433 = vst [vmem:[#allocation7 + $0x34] sm:$0xf] %v377
    %434 = vst [vmem:[#allocation7 + $0x38] sm:$0xf] %v378
    %435 = vst [vmem:[#allocation7 + $0x3c] sm:$0xf] %v379
    %436 = vst [vmem:[#allocation7 + $0x40] sm:$0xf] %v380
    %437 = vst [vmem:[#allocation7 + $0x44] sm:$0xf] %v381
    %438 = vst [vmem:[#allocation7 + $0x48] sm:$0xf] %v382
    %439 = vst [vmem:[#allocation7 + $0x4c] sm:$0xf] %v383
    %440 = vst [vmem:[#allocation7 + $0x50] sm:$0xf] %v384
    %441 = vst [vmem:[#allocation7 + $0x54] sm:$0xf] %v385
    %442 = vst [vmem:[#allocation7 + $0x58] sm:$0xf] %v386
    %443 = vst [vmem:[#allocation7 + $0x5c] sm:$0xf] %v387
    %444 = vst [vmem:[#allocation7 + $0x60] sm:$0xf] %v388
    %445 = vst [vmem:[#allocation7 + $0x64] sm:$0xf] %v389
    %446 = vst [vmem:[#allocation7 + $0x68] sm:$0xf] %v390
    %447 = vst [vmem:[#allocation7 + $0x6c] sm:$0xf] %v391
    %448 = vst [vmem:[#allocation7 + $0x70] sm:$0xf] %v392
    %449 = vst [vmem:[#allocation7 + $0x74] sm:$0xf] %v393
    %450 = vst [vmem:[#allocation7 + $0x78] sm:$0xf] %v394
    %451 = vst [vmem:[#allocation7 + $0x7c] sm:$0xf] %v395
    %452 = vst [vmem:[#allocation7 + $0x80] sm:$0xf] %v396
    %453 = vst [vmem:[#allocation7 + $0x84] sm:$0xf] %v397
    %454 = vst [vmem:[#allocation7 + $0x88] sm:$0xf] %v398
    %455 = vst [vmem:[#allocation7 + $0x8c] sm:$0xf] %v399
    %456 = vst [vmem:[#allocation7 + $0x90] sm:$0xf] %v400
    %457 = vst [vmem:[#allocation7 + $0x94] sm:$0xf] %v401
    %458 = vst [vmem:[#allocation7 + $0x98] sm:$0xf] %v402
    %459 = vst [vmem:[#allocation7 + $0x9c] sm:$0xf] %v403
    %460 = vst [vmem:[#allocation7 + $0xa0] sm:$0xf] %v404
    %461 = vst [vmem:[#allocation7 + $0xa4] sm:$0xf] %v405
    %462 = vst [vmem:[#allocation7 + $0xa8] sm:$0xf] %v406
    %463 = vst [vmem:[#allocation7 + $0xac] sm:$0xf] %v407
    %464 = vst [vmem:[#allocation7 + $0xb0] sm:$0xf] %v408
    %465 = vst [vmem:[#allocation7 + $0xb4] sm:$0xf] %v409
    %466 = vst [vmem:[#allocation7 + $0xb8] sm:$0xf] %v410
    %467 = vst [vmem:[#allocation7 + $0xbc] sm:$0xf] %v411
    %468 = vst [vmem:[#allocation7 + $0xc0] sm:$0xf] %v412
    %469 = vst [vmem:[#allocation7 + $0xc4] sm:$0xf] %v413
    %470 = vst [vmem:[#allocation7 + $0xc8] sm:$0xf] %v414
    %471 = vst [vmem:[#allocation7 + $0xcc] sm:$0xf] %v415
    %472 = vst [vmem:[#allocation7 + $0xd0] sm:$0xf] %v416
    %473 = vst [vmem:[#allocation7 + $0xd4] sm:$0xf] %v417
    %474 = vst [vmem:[#allocation7 + $0xd8] sm:$0xf] %v418
    %475 = vst [vmem:[#allocation7 + $0xdc] sm:$0xf] %v419
    // Predicated region
    $region22: #{tpu_custom_call.1} parent=1 // pred_check
      _
    $region23: #{tpu_custom_call.1} parent=1 // pred_check_branch
      %477 = sbr.rel (0) target = $region25
    $region24: #{tpu_custom_call.1} parent=1 // pred_region
      %479 = vsyncadd [#allocation4], 0
      %s480 = sshll.u32 [#allocation7], 4
      %s481 = int_to_ptr.vmem [resolvable:$true] %s480
      %s482 = sshll.u32 %s3, 4
      %s483 = int_to_ptr.hbm [resolvable:$true] %s482
      %488 = dma.vmem_to_hbm [thread:$0]  %s481, 3584, %s483, [#allocation4], 64, 64, 4
    $region25: #{tpu_custom_call.1} parent=1 // pred_fallthru
      _
    // Predicated region
    $region26: #{tpu_custom_call.1} parent=1 // pred_check
      _
    $region27: #{tpu_custom_call.1} parent=1 // pred_check_branch
      %490 = sbr.rel (0) target = $region29
    $region28: #{tpu_custom_call.1} parent=1 // pred_region
      %492 = dma.done [#allocation4], 3584
    $region29: #{tpu_custom_call.1} parent=1 // pred_fallthru
      _
    %493 = vsyncpa [#allocation3], 1
    %494 = vsyncpa [#allocation6], 1
    %495 = vsyncpa [#allocation4], 1

</llo_original>
